<compile_context>
chip_gen: v7x
topology: tpu7x:2x2x1
jax: 0.10.0
libtpu: 0.0.40
codegen_flags: <defaults>
</compile_context>

<pallas_src>
import jax
import jax.numpy as jnp
from jax.experimental import pallas as pl
from jax.experimental.pallas import tpu as pltpu


def _make_kernel(NB):
    """relu(W_dense @ x) per sample, with direct per-sample stores."""

    def kernel(w_ref, x_ref, o_ref):
        # w_ref: (GD, C)      banded dense taps (constant across the grid)
        # x_ref: (NB, C, TS)  input tile
        # o_ref: (NB, GD, TS) output tile, channel index = g*D_out + d
        w = w_ref[...]

        def one_sample(n):
            y = jnp.dot(w, x_ref[n], preferred_element_type=jnp.float32)
            o_ref[n] = jnp.maximum(y, 0.0).astype(o_ref.dtype)

        if NB <= 8:
            for n in range(NB):            # short static unroll
                one_sample(n)
        else:
            @pl.loop(0, NB)
            def _(n):
                one_sample(n)

    return kernel


def _banded_weight(weight, group, kd, padding, C, D_out, dtype):
    """Dense (G*D_out, C) matrix: W[g*D_out + d, d*group + k - padding] = w[g, k]."""
    GD = group * D_out
    w_taps = weight.reshape(group, kd)
    rows, cols, g_idx, k_idx = [], [], [], []
    for g in range(group):
        for d in range(D_out):
            for k in range(kd):
                c = d * group + k - padding
                if 0 <= c < C:             # padded taps contribute exactly zero
                    rows.append(g * D_out + d)
                    cols.append(c)
                    g_idx.append(g)
                    k_idx.append(k)
    w_dense = jnp.zeros((GD, C), jnp.float32)
    if rows:
        w_dense = w_dense.at[jnp.array(rows), jnp.array(cols)].set(
            w_taps[jnp.array(g_idx), jnp.array(k_idx)].astype(jnp.float32))
    return w_dense.astype(dtype)


def _vmem_capacity_bytes():
    try:
        cap = getattr(pltpu.get_tpu_info(), "vmem_capacity_bytes", None)
        if cap:
            return int(cap)
    except Exception:
        pass
    return 64 * 1024 * 1024                # conservative default (v7x-sized)


def _pick_tiles(N, C, GD, S, itemsize, vmem_cap):
    """Pick (NB, TS). in/out tiles are double-buffered by the pipeline, so each
    pipelined buffer gets ~1/4 of physical VMEM."""
    per_buf = max(vmem_cap // 4, 1 << 20)
    row_bytes = (C + GD) * itemsize        # bytes per (sample, spatial column)

    # Spatial tile: largest multiple of 128 dividing S that fits the budget.
    if S % 128 == 0:
        ts = 128
        limit = min(S, max(per_buf // row_bytes, 128))
        cand = 128
        while cand <= limit:
            if S % cand == 0:
                ts = cand
            cand += 128
    else:
        ts = S                             # ragged spatial axis -> full extent

    # Samples per step from the remaining budget (never exceeds N).
    nb = max(1, min(N, per_buf // max(row_bytes * ts, 1)))
    while N % nb != 0:
        nb -= 1

    # Keep >= 2 grid steps for v7x's two TensorCores by splitting the spatial
    # axis (never by shrinking NB -- v5e/v6e are single-TC and prefer big tiles).
    if (N // nb) * (S // ts) < 2 and ts % 256 == 0:
        ts //= 2
    return nb, ts


def gcw_conv(x, weight, group, kernel_size, padding):
    """x: (N, C, H, W). weight: (group, 1, kd, kh, kw). -> (N, group*D_out, H, W)."""
    N, C, H, W = x.shape
    kd, kh, kw = kernel_size
    # TODO(synk): spatial taps kh/kw > 1 are not fused; ChannelNet GCWConv always
    # uses kernel_size = (kd, 1, 1).
    assert kh == 1 and kw == 1, "fused GCWConv kernel assumes kh == kw == 1"

    D_out = (C + 2 * padding - kd) // group + 1
    GD = group * D_out
    S = H * W

    dtype = x.dtype                        # bf16 in -> bf16 out (f32 accumulation)
    x3 = x.reshape(N, C, S)                # free reshape
    w_dense = _banded_weight(weight, group, kd, padding, C, D_out, dtype)

    itemsize = jnp.dtype(dtype).itemsize
    vmem_cap = _vmem_capacity_bytes()
    NB, TS = _pick_tiles(N, C, GD, S, itemsize, vmem_cap)
    grid = (N // NB, S // TS)

    out = pl.pallas_call(
        _make_kernel(NB),
        out_shape=jax.ShapeDtypeStruct((N, GD, S), dtype),
        grid_spec=pltpu.PrefetchScalarGridSpec(
            num_scalar_prefetch=0,
            grid=grid,
            in_specs=[
                pl.BlockSpec((GD, C), lambda i, j: (0, 0)),          # banded weights
                pl.BlockSpec((NB, C, TS), lambda i, j: (i, 0, j)),   # x tile
            ],
            out_specs=pl.BlockSpec((NB, GD, TS), lambda i, j: (i, 0, j)),
        ),
        compiler_params=pltpu.CompilerParams(
            dimension_semantics=("parallel", "parallel"),
            vmem_limit_bytes=min(vmem_cap * 3 // 4, 100 * 1024 * 1024),
        ),
    )(w_dense, x3)

    # Output already in (N, g*D_out + d, spatial) order; unflatten spatial only.
    return out.reshape(N, GD, H, W)


def _reference(x, weight, group, kernel_size, padding):
    """Independent pure-JAX reference using lax 3D conv (NCDHW)."""
    N, C, H, W = x.shape
    x5 = x[:, None]                        # (N, 1, C, H, W)
    y = jax.lax.conv_general_dilated(
        x5, weight,
        window_strides=(group, 1, 1),
        padding=((padding, padding), (0, 0), (0, 0)),
        dimension_numbers=("NCDHW", "OIDHW", "NCDHW"),
    )
    y = jnp.maximum(y, 0.0)
    return y.reshape(N, -1, y.shape[-2], y.shape[-1])


if __name__ == "__main__":
    # Module config (ChannelNet-style: the kernel acts along the channel axis)
    group = 2
    kernel_size = (3, 1, 1)                # (kd, kh, kw)
    padding = 1

    # Deterministic inputs / params
    key = jax.random.PRNGKey(0)
    kx, kw_ = jax.random.split(key)
    x = jax.random.normal(kx, (2, 4, 16, 16), dtype=jnp.float32)

    # Conv3d default init: uniform(-b, b), b = 1/sqrt(fan_in), fan_in = 1*kd*kh*kw
    fan_in = kernel_size[0] * kernel_size[1] * kernel_size[2]
    bound = 1.0 / (fan_in ** 0.5)
    weight = jax.random.uniform(
        kw_, (group, 1) + kernel_size, minval=-bound, maxval=bound,
        dtype=jnp.float32)

    out = gcw_conv(x, weight, group, kernel_size, padding)
    out = jax.block_until_ready(out)

    ref = _reference(x, weight, group, kernel_size, padding)
    assert out.shape == ref.shape, (out.shape, ref.shape)
    assert jnp.allclose(out, ref, atol=1e-5, rtol=1e-5), "mismatch vs reference"

    print("KERNEL_OK")
</pallas_src>

<mosaic_0001>
module attributes {stable_mosaic.version = 11 : i64} {
  func.func @kernel(%arg0: i32, %arg1: i32, %arg2: memref<4x4xf32, #tpu.memory_space<vmem>>, %arg3: memref<2x4x128xf32, #tpu.memory_space<vmem>>, %arg4: memref<2x4x128xf32, #tpu.memory_space<vmem>>) attributes {dimension_semantics = [#tpu.dimension_semantics<parallel>, #tpu.dimension_semantics<parallel>], iteration_bounds = array<i64: 1, 2>, scalar_prefetch = 0 : i64, scratch_operands = 0 : i64, tpu.core_type = #tpu.core_type<tc>, window_params = [{pipeline_mode = #tpu.pipeline_mode<synchronous>, transform_indices = @transform_0, window_bounds = array<i64: 4, 4>}, {transform_indices = @transform_1, window_bounds = array<i64: 2, 4, 128>}, {transform_indices = @transform_2, window_bounds = array<i64: 2, 4, 128>}]} {
    %c0 = arith.constant 0 : index
    %c0_0 = arith.constant 0 : index
    %0 = vector.load %arg2[%c0, %c0_0] : memref<4x4xf32, #tpu.memory_space<vmem>>, vector<4x4xf32>
    %c0_1 = arith.constant 0 : index
    %c0_2 = arith.constant 0 : index
    %c0_3 = arith.constant 0 : index
    %1 = vector.load %arg3[%c0_1, %c0_2, %c0_3] : memref<2x4x128xf32, #tpu.memory_space<vmem>>, vector<1x4x128xf32>
    %2 = vector.shape_cast %1 : vector<1x4x128xf32> to vector<4x128xf32>
    %cst = arith.constant dense<0.000000e+00> : vector<4x128xf32>
    %3 = tpu.matmul %0, %2, %cst {dimension_numbers = #tpu.dot_dimension_numbers<[1], [0], [0], [1], [0, 0, 1, 1], [], []>} : vector<4x4xf32>, vector<4x128xf32>, vector<4x128xf32> -> vector<4x128xf32>
    %cst_4 = arith.constant 0.000000e+00 : f32
    %4 = vector.broadcast %cst_4 : f32 to vector<4x128xf32>
    %5 = arith.maximumf %3, %4 : vector<4x128xf32>
    %c0_5 = arith.constant 0 : index
    %c0_6 = arith.constant 0 : index
    %c0_7 = arith.constant 0 : index
    %6 = vector.load %arg4[%c0_5, %c0_6, %c0_7] : memref<2x4x128xf32, #tpu.memory_space<vmem>>, vector<1x4x128xf32>
    %7 = vector.shape_cast %6 : vector<1x4x128xf32> to vector<4x128xf32>
    %8 = vector.shape_cast %5 : vector<4x128xf32> to vector<1x4x128xf32>
    tpu.vector_store %arg4[%c0_5, %c0_6, %c0_7], %8 {strides = array<i32>} : memref<2x4x128xf32, #tpu.memory_space<vmem>>, vector<1x4x128xf32>,
    %c1 = arith.constant 1 : index
    %c0_8 = arith.constant 0 : index
    %c0_9 = arith.constant 0 : index
    %9 = vector.load %arg3[%c1, %c0_8, %c0_9] : memref<2x4x128xf32, #tpu.memory_space<vmem>>, vector<1x4x128xf32>
    %10 = vector.shape_cast %9 : vector<1x4x128xf32> to vector<4x128xf32>
    %cst_10 = arith.constant dense<0.000000e+00> : vector<4x128xf32>
    %11 = tpu.matmul %0, %10, %cst_10 {dimension_numbers = #tpu.dot_dimension_numbers<[1], [0], [0], [1], [0, 0, 1, 1], [], []>} : vector<4x4xf32>, vector<4x128xf32>, vector<4x128xf32> -> vector<4x128xf32>
    %cst_11 = arith.constant 0.000000e+00 : f32
    %12 = vector.broadcast %cst_11 : f32 to vector<4x128xf32>
    %13 = arith.maximumf %11, %12 : vector<4x128xf32>
    %c1_12 = arith.constant 1 : index
    %c0_13 = arith.constant 0 : index
    %c0_14 = arith.constant 0 : index
    %14 = vector.load %arg4[%c1_12, %c0_13, %c0_14] : memref<2x4x128xf32, #tpu.memory_space<vmem>>, vector<1x4x128xf32>
    %15 = vector.shape_cast %14 : vector<1x4x128xf32> to vector<4x128xf32>
    %16 = vector.shape_cast %13 : vector<4x128xf32> to vector<1x4x128xf32>
    tpu.vector_store %arg4[%c1_12, %c0_13, %c0_14], %16 {strides = array<i32>} : memref<2x4x128xf32, #tpu.memory_space<vmem>>, vector<1x4x128xf32>,
    return
  }
  func.func @transform_0(%arg0: i32, %arg1: i32) -> (i32, i32) {
    %c0_i32 = arith.constant 0 : i32
    %c0_i32_0 = arith.constant 0 : i32
    %c0_i32_1 = arith.constant 0 : i32
    return %c0_i32, %c0_i32_0 : i32, i32
  }
  func.func @transform_1(%arg0: i32, %arg1: i32) -> (i32, i32, i32) {
    %c0_i32 = arith.constant 0 : i32
    %c0_i32_0 = arith.constant 0 : i32
    return %arg0, %c0_i32, %arg1 : i32, i32, i32
  }
  func.func @transform_2(%arg0: i32, %arg1: i32) -> (i32, i32, i32) {
    %c0_i32 = arith.constant 0 : i32
    %c0_i32_0 = arith.constant 0 : i32
    return %arg0, %c0_i32, %arg1 : i32, i32, i32
  }
}

</mosaic_0001>

<llo_original>
// kernel: tpu_custom_call.1
$region0: #{tpu_custom_call.1}
  #allocation0 [shape = 'u32[]', space=smem, size = 0x4, offset = 0x4, fixed_abs, tag = 'smem constant byte address 0x4 - core index']
  #allocation1 [shape = 'u32[144,128]{1,0:T(1,128)}', space=vmem, size = 0x12000, scoped, tag = 'internal scratch']
  %s0 = inlined_call_operand.hbm [shape: f32[4,4], index: 0, kind: input, shape index: {}]
  %s1 = inlined_call_operand.hbm [shape: f32[2,4,256], index: 1, kind: input, shape index: {}]
  %s2 = inlined_call_operand.hbm [shape: f32[2,4,256], index: 2, kind: output, shape index: {}]
  %s3 = sld [smem:[#allocation0]]
  $region49: #{tpu_custom_call.1} parent=0
    _
  %s5 = ssub.s32 1, %s3
  %s6 = scalar_select 0, %s5, %s3
  $region1: #{tpu_custom_call.1} parent=0
    #allocation2 [shape = 'u8[2048]{0}', space=vmem, size = 0x800, scoped, tag = 'input window, operand 0, single buffered']
    #allocation3 [shape = 's32[2]{0}', space=sflag, size = 0x8, scoped, tag = 'scoped memory for tpu_custom_call.1']
    #allocation4 [shape = 's32[2]{0}', space=sflag, size = 0x8, scoped, tag = 'scoped memory for tpu_custom_call.1']
    #allocation5 [shape = 'u8[8192]{0}', space=vmem, size = 0x2000, scoped, tag = 'input window, operand 1']
    #allocation6 [shape = 's32[2]{0}', space=sflag, size = 0x8, scoped, tag = 'scoped memory for tpu_custom_call.1']
    #allocation7 [shape = 'u8[8192]{0}', space=vmem, size = 0x2000, scoped, tag = 'output window, operand 0']
    %7 = vsyncpa [#allocation3], 0
    %8 = vsyncpa [#allocation6], 0
    %s9 = scalar_lea.sflag [#allocation6], 1
    %10 = vsyncpa %s9, 0
    %11 = vsyncpa [#allocation4], 0
    %s12 = scalar_lea.sflag [#allocation4], 1
    %13 = vsyncpa %s12, 0
    loop: start=0, step=1, limit=4
    $region2: #{tpu_custom_call.1} parent=1 // loop_pre_header
      _
    $region3: #{tpu_custom_call.1} parent=1 // loop_header
      %s15 = sphi 0, %s19
      %p16 = scmp.ge.s32.totalorder %s15, 4
      %s22 = sphi 0, %s34
      %s23 = sphi 0, %s30
      %s24 = sphi 0, %s22
      %s25 = sphi 0, %s23
      %s26 = sphi 0, %s24
      %s27 = sphi 0, %s25
      %s35 = sphi 0, %s35
      %s37 = sphi 0, %s35
      %s38 = sphi 0, %s37
      %s52 = sphi 0, %s38
      %s60 = sphi 0, %s62
      %s63 = sphi 0, %s60
      %s64 = sphi 0, %s63
      %s80 = sphi 0, %s64
      %s88 = sphi 0, %s90
      %s91 = sphi 0, %s88
      %s92 = sphi 0, %s91
      %s108 = sphi 0, %s92
    $region4: #{tpu_custom_call.1} parent=1 // loop_header_branch
      %18 = sbr.rel (%p16) target = $region8
    $region5: #{tpu_custom_call.1} parent=1 // loop_body
      %s20 = ssub.s32 %s15, 1
      %s21 = ssub.s32 %s15, 2
      %s28 = sadd.s32 1, %s23
      %p29 = scmp.ge.s32.totalorder %s28, 2
      %s30 = scalar_select %p29, 0, %s28
      %s31 = sadd.s32 1, %s22
      %s32 = scalar_select %p29, %s31, %s22
      %p33 = scmp.ge.s32.totalorder %s32, 1
      %s34 = scalar_select %p33, 0, %s32
      %s36 = sadd.s32 %s35, 1
      %p39 = scmp.eq.s32.totalorder %s15, 1
      %p40 = scmp.ne.s32.totalorder %s35, %s37
      %p41 = scmp.eq.s32.totalorder %s15, 0
      %p42 = por %p40, %p41
      %p43 = scmp.ne.s32.totalorder %s35, %s37
      %p44 = scmp.eq.s32.totalorder %s20, 1
      %p45 = por %p43, %p44
      %p46 = scmp.ne.s32.totalorder %s37, %s38
      %p47 = scmp.eq.s32.totalorder %s20, 0
      %p48 = por %p46, %p47
      %p49 = scmp.ne.s32.totalorder %s37, %s38
      %p50 = scmp.eq.s32.totalorder %s21, 1
      %p51 = por %p49, %p50
      %p53 = scmp.ne.s32.totalorder %s38, %s52
      %p54 = scmp.eq.s32.totalorder %s21, 0
      %p55 = por %p53, %p54
      %s56 = ssub.s32 %s22, %s34
      %s57 = ssub.s32 %s23, %s30
      %s58 = sor.u32 %s56, %s57
      %p59 = scmp.eq.s32.totalorder %s58, 0
      %s61 = sadd.s32 %s60, 1
      %s62 = scalar_select %p59, %s60, %s61
      %p65 = pneg %p59
      %p66 = scmp.eq.s32.totalorder %s15, 1
      %p67 = por %p65, %p66
      %p68 = scmp.ne.s32.totalorder %s60, %s63
      %p69 = scmp.eq.s32.totalorder %s15, 0
      %p70 = por %p68, %p69
      %p71 = scmp.ne.s32.totalorder %s60, %s63
      %p72 = scmp.eq.s32.totalorder %s20, 1
      %p73 = por %p71, %p72
      %p74 = scmp.ne.s32.totalorder %s63, %s64
      %p75 = scmp.eq.s32.totalorder %s20, 0
      %p76 = por %p74, %p75
      %p77 = scmp.ne.s32.totalorder %s63, %s64
      %p78 = scmp.eq.s32.totalorder %s21, 1
      %p79 = por %p77, %p78
      %p81 = scmp.ne.s32.totalorder %s64, %s80
      %p82 = scmp.eq.s32.totalorder %s21, 0
      %p83 = por %p81, %p82
      %s84 = ssub.s32 %s22, %s34
      %s85 = ssub.s32 %s23, %s30
      %s86 = sor.u32 %s84, %s85
      %p87 = scmp.eq.s32.totalorder %s86, 0
      %s89 = sadd.s32 %s88, 1
      %s90 = scalar_select %p87, %s88, %s89
      %p93 = pneg %p87
      %p94 = scmp.eq.s32.totalorder %s15, 1
      %p95 = por %p93, %p94
      %p96 = scmp.ne.s32.totalorder %s88, %s91
      %p97 = scmp.eq.s32.totalorder %s15, 0
      %p98 = por %p96, %p97
      %p99 = scmp.ne.s32.totalorder %s88, %s91
      %p100 = scmp.eq.s32.totalorder %s20, 1
      %p101 = por %p99, %p100
      %p102 = scmp.ne.s32.totalorder %s91, %s92
      %p103 = scmp.eq.s32.totalorder %s20, 0
      %p104 = por %p102, %p103
      %p105 = scmp.ne.s32.totalorder %s91, %s92
      %p106 = scmp.eq.s32.totalorder %s21, 1
      %p107 = por %p105, %p106
      %p109 = scmp.ne.s32.totalorder %s92, %s108
      %p110 = scmp.eq.s32.totalorder %s21, 0
      %p111 = por %p109, %p110
      %p112 = scmp.le.s32.totalorder 1, %s15
      %p113 = scmp.lt.s32.totalorder %s15, 3
      %p114 = pnand %p112, %p113
      %p115 = pneg %p114
      // Predicated region
      $region9: #{tpu_custom_call.1} parent=5 // pred_check
        _
      $region10: #{tpu_custom_call.1} parent=5 // pred_check_branch
        %117 = sbr.rel (%p114) target = $region12
      $region11: #{tpu_custom_call.1} parent=5 // pred_region
        %s118 = ssub.s32 %s15, 1
        // Predicated region
        $region13: #{tpu_custom_call.1} parent=11 // pred_check
          %p119 = pneg %p48
        $region14: #{tpu_custom_call.1} parent=11 // pred_check_branch
          %121 = sbr.rel (%p119) target = $region16
        $region15: #{tpu_custom_call.1} parent=11 // pred_region
          %s123 = ssub.s32 64, 64
          %124 = vsyncadd [#allocation3], %s123
          %s126 = sshll.u32 [#allocation2], 4
          %s127 = int_to_ptr.vmem [resolvable:$true] %s126
          %129 = dma.hbm_to_vmem [thread:$0]  %s0, 64, %s127, [#allocation3]
        $region16: #{tpu_custom_call.1} parent=11 // pred_fallthru
          _
      $region12: #{tpu_custom_call.1} parent=5 // pred_fallthru
        _
      %p130 = scmp.lt.s32.totalorder %s15, 2
      // Predicated region
      $region17: #{tpu_custom_call.1} parent=5 // pred_check
        %p131 = pneg %p130
      $region18: #{tpu_custom_call.1} parent=5 // pred_check_branch
        %133 = sbr.rel (%p131) target = $region20
      $region19: #{tpu_custom_call.1} parent=5 // pred_region
        // Predicated region
        $region21: #{tpu_custom_call.1} parent=19 // pred_check
          %p134 = pneg %p70
        $region22: #{tpu_custom_call.1} parent=19 // pred_check_branch
          %136 = sbr.rel (%p134) target = $region24
        $region23: #{tpu_custom_call.1} parent=19 // pred_region
          %s137 = sand.u32 %s60, 1
          %s138 = scalar_lea.sflag [#allocation6], %s137
          %s139 = sand.u32 %s60, 1
          %s140 = smul.addr %s139, 8
          %s141 = scalar_lea.vmem [#allocation5], %s140
          %s142 = smul.u32 2, %s22
          %s144 = ssub.s32 128, 128
          %145 = vsyncadd %s138, %s144
          %s146 = smul.addr %s142, 2
          %s147 = sadd.s32 %s23, %s146
          %s148 = smul.addr %s147, 64
          %s149 = scalar_lea.hbm %s1, %s148
          %s150 = sshll.u32 %s141, 4
          %s151 = int_to_ptr.vmem [resolvable:$true] %s150
          %156 = dma.hbm_to_vmem [thread:$0]  %s149, 128, %s151, %s138, 128, 64, 4
        $region24: #{tpu_custom_call.1} parent=19 // pred_fallthru
          _
      $region20: #{tpu_custom_call.1} parent=5 // pred_fallthru
        _
      %p157 = scmp.le.s32.totalorder 1, %s15
      %p158 = scmp.lt.s32.totalorder %s15, 3
      %p159 = pnand %p157, %p158
      %p160 = pneg %p159
      // Predicated region
      $region25: #{tpu_custom_call.1} parent=5 // pred_check
        _
      $region26: #{tpu_custom_call.1} parent=5 // pred_check_branch
        %162 = sbr.rel (%p159) target = $region28
      $region27: #{tpu_custom_call.1} parent=5 // pred_region
        %s163 = ssub.s32 %s15, 1
        // Predicated region
        $region29: #{tpu_custom_call.1} parent=27 // pred_check
          %p164 = pneg %p48
        $region30: #{tpu_custom_call.1} parent=27 // pred_check_branch
          %166 = sbr.rel (%p164) target = $region32
        $region31: #{tpu_custom_call.1} parent=27 // pred_region
          %167 = dma.done [#allocation3], 64
        $region32: #{tpu_custom_call.1} parent=27 // pred_fallthru
          _
        %s168 = sand.u32 %s63, 1
        %s169 = scalar_lea.sflag [#allocation6], %s168
        %s170 = sand.u32 %s63, 1
        %s171 = smul.addr %s170, 8
        %s172 = scalar_lea.vmem [#allocation5], %s171
        // Predicated region
        $region33: #{tpu_custom_call.1} parent=27 // pred_check
          %p173 = pneg %p76
        $region34: #{tpu_custom_call.1} parent=27 // pred_check_branch
          %175 = sbr.rel (%p173) target = $region36
        $region35: #{tpu_custom_call.1} parent=27 // pred_region
          %176 = dma.done %s169, 128
        $region36: #{tpu_custom_call.1} parent=27 // pred_fallthru
          _
        %p177 = pneg %p48
        %p178 = pneg %p45
        %s179 = sand.u32 %s63, 1
        %s180 = scalar_lea.sflag [#allocation6], %s179
        %s181 = sand.u32 %s63, 1
        %s182 = smul.addr %s181, 8
        %s183 = scalar_lea.vmem [#allocation5], %s182
        %p184 = pneg %p76
        %p185 = pneg %p73
        %p186 = pneg %p104
        %p187 = pneg %p101
        %s188 = sand.u32 %s91, 1
        %s189 = scalar_lea.sflag [#allocation4], %s188
        %s190 = sand.u32 %s91, 1
        %s191 = smul.addr %s190, 8
        %s192 = scalar_lea.vmem [#allocation7], %s191
        %s193 = smul.u32 2, %s24
        %s194 = smul.u32 2, %s24
        %v195 = vld [vmem:[#allocation2] sm:$0xf]
        %v196 = vld [vmem:[%s172] sm:$0xf]
        %vm197 = vcmask 31744
        %v199 = vsel %vm197, %v195, 0
        %vm201 = vcmask 1043456
        %v203 = vsel %vm201, %v196, 0
        %205 = vmatprep.subr.mxu0 0.0
        %206 = vmatpush1.msra.mxu0 %v203
        %207 = vmatprep.subr.mxu0 0.0
        %208 = vmatpush1.msra.mxu0 0.0
        %209 = vmatprep.subr.mxu0 0.0
        %210 = vmatpush1.msra.mxu0 0.0
        %211 = vmatprep.subr.mxu0 0.0
        %212 = vmatpush1.msra.mxu0 0.0
        %213 = vmatprep.subr.mxu0 0.0
        %214 = vmatpush1.msra.mxu0 0.0
        %215 = vmatprep.subr.mxu0 0.0
        %216 = vmatpush1.msra.mxu0 0.0
        %217 = vmatprep.subr.mxu0 0.0
        %218 = vmatpush1.msra.mxu0 0.0
        %219 = vmatprep.subr.mxu0 0.0
        %220 = vmatpush1.msra.mxu0 0.0
        %221 = vmatprep.subr.mxu0 0.0
        %222 = vmatpush1.msra.mxu0 0.0
        %223 = vmatprep.subr.mxu0 0.0
        %224 = vmatpush1.msra.mxu0 0.0
        %225 = vmatprep.subr.mxu0 0.0
        %226 = vmatpush1.msra.mxu0 0.0
        %227 = vmatprep.subr.mxu0 0.0
        %228 = vmatpush1.msra.mxu0 0.0
        %229 = vmatprep.subr.mxu0 0.0
        %230 = vmatpush1.msra.mxu0 0.0
        %231 = vmatprep.subr.mxu0 0.0
        %232 = vmatpush1.msra.mxu0 0.0
        %233 = vmatprep.subr.mxu0 0.0
        %234 = vmatpush1.msra.mxu0 0.0
        %235 = vmatprep.subr.mxu0 0.0
        %236 = vmatpush1.msra.mxu0 0.0
        %237 = vmatprep.subr.mxu0 0.0
        %238 = vmatpush1.msra.mxu0 0.0
        %239 = vmatprep.subr.mxu0 0.0
        %240 = vmatpush1.msra.mxu0 0.0
        %241 = vmatprep.subr.mxu0 0.0
        %242 = vmatpush1.msra.mxu0 0.0
        %243 = vmatprep.subr.mxu0 0.0
        %244 = vmatpush1.msra.mxu0 0.0
        %245 = vmatprep.subr.mxu0 0.0
        %246 = vmatpush1.msra.mxu0 0.0
        %247 = vmatprep.subr.mxu0 0.0
        %248 = vmatpush1.msra.mxu0 0.0
        %249 = vmatprep.subr.mxu0 0.0
        %250 = vmatpush1.msra.mxu0 0.0
        %251 = vmatprep.subr.mxu0 0.0
        %252 = vmatpush1.msra.mxu0 0.0
        %253 = vmatprep.subr.mxu0 0.0
        %254 = vmatpush1.msra.mxu0 0.0
        %255 = vmatprep.subr.mxu0 0.0
        %256 = vmatpush1.msra.mxu0 0.0
        %257 = vmatprep.subr.mxu0 0.0
        %258 = vmatpush1.msra.mxu0 0.0
        %259 = vmatprep.subr.mxu0 0.0
        %260 = vmatpush1.msra.mxu0 0.0
        %261 = vmatprep.subr.mxu0 0.0
        %262 = vmatpush1.msra.mxu0 0.0
        %263 = vmatprep.subr.mxu0 0.0
        %264 = vmatpush1.msra.mxu0 0.0
        %265 = vmatprep.subr.mxu0 0.0
        %266 = vmatpush1.msra.mxu0 0.0
        %267 = vmatprep.subr.mxu0 0.0
        %268 = vmatpush1.msra.mxu0 0.0
        %269 = vmatprep.mubr.f32.mxu0 0.0
        %270 = vmatmul.mubr.f32.gmra.mrb[0].mxu0 %v199
        %v271 = vpop.f32.mrb[0].mxu0
        %v272 = vadd.f32 0.0, %v271
        %v273 = vpop.f32.mrb[0].mxu0
        %274 = vdwg.mxu0
        %v275 = vmax.f32 %v272, 0.0
        %276 = vst [vmem:[%s192] sm:$0xf] %v275
        %s277 = scalar_lea.vmem %s172, 4 [#allocation5]
        %v278 = vld [vmem:[%s277] sm:$0xf]
        %v280 = vsel %vm201, %v278, 0
        %282 = vmatprep.subr.mxu0 0.0
        %283 = vmatpush1.msra.mxu0 %v280
        %284 = vmatprep.subr.mxu0 0.0
        %285 = vmatpush1.msra.mxu0 0.0
        %286 = vmatprep.subr.mxu0 0.0
        %287 = vmatpush1.msra.mxu0 0.0
        %288 = vmatprep.subr.mxu0 0.0
        %289 = vmatpush1.msra.mxu0 0.0
        %290 = vmatprep.subr.mxu0 0.0
        %291 = vmatpush1.msra.mxu0 0.0
        %292 = vmatprep.subr.mxu0 0.0
        %293 = vmatpush1.msra.mxu0 0.0
        %294 = vmatprep.subr.mxu0 0.0
        %295 = vmatpush1.msra.mxu0 0.0
        %296 = vmatprep.subr.mxu0 0.0
        %297 = vmatpush1.msra.mxu0 0.0
        %298 = vmatprep.subr.mxu0 0.0
        %299 = vmatpush1.msra.mxu0 0.0
        %300 = vmatprep.subr.mxu0 0.0
        %301 = vmatpush1.msra.mxu0 0.0
        %302 = vmatprep.subr.mxu0 0.0
        %303 = vmatpush1.msra.mxu0 0.0
        %304 = vmatprep.subr.mxu0 0.0
        %305 = vmatpush1.msra.mxu0 0.0
        %306 = vmatprep.subr.mxu0 0.0
        %307 = vmatpush1.msra.mxu0 0.0
        %308 = vmatprep.subr.mxu0 0.0
        %309 = vmatpush1.msra.mxu0 0.0
        %310 = vmatprep.subr.mxu0 0.0
        %311 = vmatpush1.msra.mxu0 0.0
        %312 = vmatprep.subr.mxu0 0.0
        %313 = vmatpush1.msra.mxu0 0.0
        %314 = vmatprep.subr.mxu0 0.0
        %315 = vmatpush1.msra.mxu0 0.0
        %316 = vmatprep.subr.mxu0 0.0
        %317 = vmatpush1.msra.mxu0 0.0
        %318 = vmatprep.subr.mxu0 0.0
        %319 = vmatpush1.msra.mxu0 0.0
        %320 = vmatprep.subr.mxu0 0.0
        %321 = vmatpush1.msra.mxu0 0.0
        %322 = vmatprep.subr.mxu0 0.0
        %323 = vmatpush1.msra.mxu0 0.0
        %324 = vmatprep.subr.mxu0 0.0
        %325 = vmatpush1.msra.mxu0 0.0
        %326 = vmatprep.subr.mxu0 0.0
        %327 = vmatpush1.msra.mxu0 0.0
        %328 = vmatprep.subr.mxu0 0.0
        %329 = vmatpush1.msra.mxu0 0.0
        %330 = vmatprep.subr.mxu0 0.0
        %331 = vmatpush1.msra.mxu0 0.0
        %332 = vmatprep.subr.mxu0 0.0
        %333 = vmatpush1.msra.mxu0 0.0
        %334 = vmatprep.subr.mxu0 0.0
        %335 = vmatpush1.msra.mxu0 0.0
        %336 = vmatprep.subr.mxu0 0.0
        %337 = vmatpush1.msra.mxu0 0.0
        %338 = vmatprep.subr.mxu0 0.0
        %339 = vmatpush1.msra.mxu0 0.0
        %340 = vmatprep.subr.mxu0 0.0
        %341 = vmatpush1.msra.mxu0 0.0
        %342 = vmatprep.subr.mxu0 0.0
        %343 = vmatpush1.msra.mxu0 0.0
        %344 = vmatprep.subr.mxu0 0.0
        %345 = vmatpush1.msra.mxu0 0.0
        %346 = vmatprep.mubr.f32.mxu0 0.0
        %347 = vmatmul.mubr.f32.gmra.mrb[0].mxu0 %v199
        %v348 = vpop.f32.mrb[0].mxu0
        %v349 = vadd.f32 0.0, %v348
        %v350 = vpop.f32.mrb[0].mxu0
        %351 = vdwg.mxu0
        %v352 = vmax.f32 %v349, 0.0
        %s353 = scalar_lea.vmem %s192, 4 [#allocation7]
        %354 = vst [vmem:[%s353] sm:$0xf] %v352
        %s355 = sand.u32 %s91, 1
        %s356 = scalar_lea.sflag [#allocation4], %s355
        %s357 = sand.u32 %s91, 1
        %s358 = smul.addr %s357, 8
        %s359 = scalar_lea.vmem [#allocation7], %s358
        // Predicated region
        $region37: #{tpu_custom_call.1} parent=27 // pred_check
          %p360 = pneg %p101
        $region38: #{tpu_custom_call.1} parent=27 // pred_check_branch
          %362 = sbr.rel (%p360) target = $region40
        $region39: #{tpu_custom_call.1} parent=27 // pred_region
          %s363 = smul.u32 2, %s24
          %s365 = ssub.s32 128, 128
          %366 = vsyncadd %s356, %s365
          %s367 = smul.addr %s363, 2
          %s368 = sadd.s32 %s25, %s367
          %s369 = smul.addr %s368, 64
          %s370 = scalar_lea.hbm %s2, %s369
          %s371 = sshll.u32 %s359, 4
          %s372 = int_to_ptr.vmem [resolvable:$true] %s371
          %377 = dma.vmem_to_hbm [thread:$0]  %s372, 128, %s370, %s356, 64, 128, 4
        $region40: #{tpu_custom_call.1} parent=27 // pred_fallthru
          _
      $region28: #{tpu_custom_call.1} parent=5 // pred_fallthru
        _
      %p378 = scmp.le.s32.totalorder 2, %s15
      // Predicated region
      $region41: #{tpu_custom_call.1} parent=5 // pred_check
        %p379 = pneg %p378
      $region42: #{tpu_custom_call.1} parent=5 // pred_check_branch
        %381 = sbr.rel (%p379) target = $region44
      $region43: #{tpu_custom_call.1} parent=5 // pred_region
        %s382 = ssub.s32 %s15, 2
        // Predicated region
        $region45: #{tpu_custom_call.1} parent=43 // pred_check
          %p383 = pneg %p107
        $region46: #{tpu_custom_call.1} parent=43 // pred_check_branch
          %385 = sbr.rel (%p383) target = $region48
        $region47: #{tpu_custom_call.1} parent=43 // pred_region
          %s386 = sand.u32 %s92, 1
          %s387 = scalar_lea.sflag [#allocation4], %s386
          %s388 = sand.u32 %s92, 1
          %s389 = smul.addr %s388, 8
          %s390 = scalar_lea.vmem [#allocation7], %s389
          %391 = dma.done %s387, 128
        $region48: #{tpu_custom_call.1} parent=43 // pred_fallthru
          _
      $region44: #{tpu_custom_call.1} parent=5 // pred_fallthru
        _
    $region6: #{tpu_custom_call.1} parent=1 // loop_footer
      %s19 = sadd.s32 1, %s15
    $region7: #{tpu_custom_call.1} parent=1 // loop_footer_branch
      %14 = sbr.rel target = $region3
    $region8: #{tpu_custom_call.1} parent=1 // loop_exit
      _
    %392 = vsyncpa [#allocation3], 1
    %s393 = scalar_lea.sflag [#allocation3], 1
    %394 = vsyncpa %s393, 1
    %395 = vsyncpa [#allocation6], 1
    %s396 = scalar_lea.sflag [#allocation6], 1
    %397 = vsyncpa %s396, 1
    %398 = vsyncpa [#allocation4], 1
    %s399 = scalar_lea.sflag [#allocation4], 1
    %400 = vsyncpa %s399, 1

</llo_original>
